<compile_context>
chip_gen: v6e
topology: v6e:2x2x1
jax: 0.10.0
libtpu: 0.0.40
codegen_flags: <defaults>
</compile_context>

<pallas_src>
import functools
import math

import jax
import jax.numpy as jnp
from jax.experimental import pallas as pl
from jax.experimental.pallas import tpu as pltpu


MASK_VALUE = -1e10   # matches the PyTorch module's masked_fill value
M_INIT = -1e30       # finite "minus infinity" for the running max


# --------------------------------------------------------------------------
# Stage 1: fused QKV projection, per (head, batch, q-tile)
# --------------------------------------------------------------------------
def _qkv_proj_kernel(x_ref, w_ref, b_ref, q_ref, k_ref, v_ref, *, head_dim, scale):
    x = x_ref[0]                                    # (tq, C)
    w = w_ref[0]                                    # (C, 3*hd)  = [Wq|Wk|Wv]_head
    b = b_ref[0]                                    # (1, 3*hd)  fused bias
    qkv = jnp.dot(x, w, preferred_element_type=jnp.float32) + b   # one MXU matmul
    q_ref[0, 0] = (qkv[:, :head_dim] * scale).astype(q_ref.dtype)  # fold 1/sqrt(hd)
    k_ref[0, 0] = qkv[:, head_dim:2 * head_dim].astype(k_ref.dtype)
    v_ref[0, 0] = qkv[:, 2 * head_dim:3 * head_dim].astype(v_ref.dtype)


# --------------------------------------------------------------------------
# Stage 2: flash attention (online softmax) + fused output projection
# --------------------------------------------------------------------------
def _flash_attn_kernel(q_ref, k_ref, v_ref, wp_ref, bp_ref, o_ref,
                       m_scr, l_scr, acc_scr, out_scr, *, tq, tkv):
    qi = pl.program_id(1)
    h = pl.program_id(2)
    kv = pl.program_id(3)
    n_head = pl.num_programs(2)
    n_kv = pl.num_programs(3)

    # Zero the (tq, C) projected-output accumulator once per (batch, q-tile).
    @pl.when(jnp.logical_and(h == 0, kv == 0))
    def _():
        out_scr[...] = jnp.zeros_like(out_scr)

    # Reset online-softmax state at the start of every head's kv sweep.
    @pl.when(kv == 0)
    def _():
        m_scr[...] = jnp.full(m_scr.shape, M_INIT, jnp.float32)
        l_scr[...] = jnp.zeros_like(l_scr)
        acc_scr[...] = jnp.zeros_like(acc_scr)

    # Skip kv blocks that lie entirely above the causal diagonal.
    @pl.when(kv * tkv < (qi + 1) * tq)
    def _():
        q = q_ref[0, 0]                             # (tq, hd), pre-scaled
        k = k_ref[0, 0]                             # (tkv, hd)
        v = v_ref[0, 0]                             # (tkv, hd)
        s = jax.lax.dot_general(q, k, (((1,), (1,)), ((), ())),
                                preferred_element_type=jnp.float32)   # (tq, tkv)
        row = jax.lax.broadcasted_iota(jnp.int32, (tq, tkv), 0) + qi * tq
        col = jax.lax.broadcasted_iota(jnp.int32, (tq, tkv), 1) + kv * tkv
        s = jnp.where(row >= col, s, jnp.float32(MASK_VALUE))

        m_prev = m_scr[...]
        m_new = jnp.maximum(m_prev, jnp.max(s, axis=-1, keepdims=True))
        alpha = jnp.exp(m_prev - m_new)
        p = jnp.exp(s - m_new)
        l_scr[...] = alpha * l_scr[...] + jnp.sum(p, axis=-1, keepdims=True)
        acc_scr[...] = alpha * acc_scr[...] + jnp.dot(
            p, v, preferred_element_type=jnp.float32)
        m_scr[...] = m_new

    # End of this head's kv sweep: normalize and fold this head's output
    # projection into the (tq, C) accumulator (per-head y never touches HBM).
    @pl.when(kv == n_kv - 1)
    def _():
        y_h = acc_scr[...] * pl.reciprocal(l_scr[...], approx=True)   # (tq, hd)
        out_scr[...] += jnp.dot(y_h, wp_ref[h],
                                preferred_element_type=jnp.float32)

    # All heads done: add the projection bias and emit the output tile.
    @pl.when(jnp.logical_and(h == n_head - 1, kv == n_kv - 1))
    def _():
        o_ref[0] = (out_scr[...] + bp_ref[...]).astype(o_ref.dtype)


# --------------------------------------------------------------------------
# Wrapper
# --------------------------------------------------------------------------
def causal_self_attention(x, params, n_head, *, q_block=128, kv_block=128):
    """x: [B, T, C] f32.  params: (C, C) weights laid out as x @ W, (1, C) biases."""
    B, T, C = x.shape
    assert C % n_head == 0
    hd = C // n_head
    tq = min(q_block, T)
    tkv = min(kv_block, T)
    assert T % tq == 0 and T % tkv == 0
    n_q = T // tq
    n_kv = T // tkv
    scale = 1.0 / math.sqrt(hd)

    # ---- pack per-head fused QKV weights / biases and per-head proj rows ----
    def _heads_cols(w):                      # (C_in, C) -> (H, C_in, hd)
        return w.reshape(C, n_head, hd).transpose(1, 0, 2)

    w_qkv = jnp.concatenate(
        [_heads_cols(params["wq"]), _heads_cols(params["wk"]),
         _heads_cols(params["wv"])], axis=-1)                    # (H, C, 3*hd)
    b_qkv = jnp.concatenate(
        [params["bq"].reshape(n_head, 1, hd),
         params["bk"].reshape(n_head, 1, hd),
         params["bv"].reshape(n_head, 1, hd)], axis=-1)          # (H, 1, 3*hd)
    wp_h = params["wp"].reshape(n_head, hd, C)                   # (H, hd, C)
    bp = params["bp"]                                            # (1, C)

    # ---- Stage 1: fused QKV projection --------------------------------------
    q, k, v = pl.pallas_call(
        functools.partial(_qkv_proj_kernel, head_dim=hd, scale=scale),
        out_shape=(
            jax.ShapeDtypeStruct((B, n_head, T, hd), x.dtype),
            jax.ShapeDtypeStruct((B, n_head, T, hd), x.dtype),
            jax.ShapeDtypeStruct((B, n_head, T, hd), x.dtype),
        ),
        grid_spec=pltpu.PrefetchScalarGridSpec(
            num_scalar_prefetch=0,
            grid=(n_head, B, n_q),        # head outermost -> weights stay resident
            in_specs=[
                pl.BlockSpec((1, tq, C), lambda h, b, i: (b, i, 0)),
                pl.BlockSpec((1, C, 3 * hd), lambda h, b, i: (h, 0, 0)),
                pl.BlockSpec((1, 1, 3 * hd), lambda h, b, i: (h, 0, 0)),
            ],
            out_specs=[
                pl.BlockSpec((1, 1, tq, hd), lambda h, b, i: (b, h, i, 0)),
                pl.BlockSpec((1, 1, tq, hd), lambda h, b, i: (b, h, i, 0)),
                pl.BlockSpec((1, 1, tq, hd), lambda h, b, i: (b, h, i, 0)),
            ],
        ),
        compiler_params=pltpu.CompilerParams(
            dimension_semantics=("parallel", "parallel", "parallel")),
    )(x, w_qkv, b_qkv)

    # ---- Stage 2: flash attention + fused output projection -----------------
    out = pl.pallas_call(
        functools.partial(_flash_attn_kernel, tq=tq, tkv=tkv),
        out_shape=jax.ShapeDtypeStruct((B, T, C), x.dtype),
        grid_spec=pltpu.PrefetchScalarGridSpec(
            num_scalar_prefetch=0,
            grid=(B, n_q, n_head, n_kv),
            in_specs=[
                pl.BlockSpec((1, 1, tq, hd), lambda b, i, h, j: (b, h, i, 0)),   # q
                pl.BlockSpec((1, 1, tkv, hd), lambda b, i, h, j: (b, h, j, 0)),  # k
                pl.BlockSpec((1, 1, tkv, hd), lambda b, i, h, j: (b, h, j, 0)),  # v
                pl.BlockSpec((n_head, hd, C), lambda b, i, h, j: (0, 0, 0)),     # W_proj (resident)
                pl.BlockSpec((1, C), lambda b, i, h, j: (0, 0)),                 # b_proj (resident)
            ],
            out_specs=pl.BlockSpec((1, tq, C), lambda b, i, h, j: (b, i, 0)),
            scratch_shapes=[
                pltpu.VMEM((tq, 1), jnp.float32),    # running max m
                pltpu.VMEM((tq, 1), jnp.float32),    # running denom l
                pltpu.VMEM((tq, hd), jnp.float32),   # per-head attention acc
                pltpu.VMEM((tq, C), jnp.float32),    # projected-output acc
            ],
        ),
        compiler_params=pltpu.CompilerParams(
            dimension_semantics=("parallel", "parallel", "arbitrary", "arbitrary")),
    )(q, k, v, wp_h, bp)

    return out


# --------------------------------------------------------------------------
# Pure-JAX reference (mirrors the PyTorch forward, eval mode)
# --------------------------------------------------------------------------
def _reference(x, params, n_head):
    B, T, C = x.shape
    hd = C // n_head

    def lin(z, w, b):
        return z @ w + b[0]

    q = lin(x, params["wq"], params["bq"]).reshape(B, T, n_head, hd).transpose(0, 2, 1, 3)
    k = lin(x, params["wk"], params["bk"]).reshape(B, T, n_head, hd).transpose(0, 2, 1, 3)
    v = lin(x, params["wv"], params["bv"]).reshape(B, T, n_head, hd).transpose(0, 2, 1, 3)

    att = jnp.einsum("bhqd,bhkd->bhqk", q, k) * (1.0 / math.sqrt(hd))
    mask = jnp.tril(jnp.ones((T, T), dtype=bool))
    att = jnp.where(mask[None, None], att, MASK_VALUE)
    att = jax.nn.softmax(att, axis=-1)
    y = jnp.einsum("bhqk,bhkd->bhqd", att, v)
    y = y.transpose(0, 2, 1, 3).reshape(B, T, C)
    return lin(y, params["wp"], params["bp"])


def _make_params(key, C):
    keys = jax.random.split(key, 8)
    bound = 1.0 / math.sqrt(C)   # PyTorch nn.Linear default init range

    def uinit(k, shape):
        return jax.random.uniform(k, shape, jnp.float32, -bound, bound)

    return {
        "wq": uinit(keys[0], (C, C)), "bq": uinit(keys[1], (1, C)),
        "wk": uinit(keys[2], (C, C)), "bk": uinit(keys[3], (1, C)),
        "wv": uinit(keys[4], (C, C)), "bv": uinit(keys[5], (1, C)),
        "wp": uinit(keys[6], (C, C)), "bp": uinit(keys[7], (1, C)),
    }


if __name__ == "__main__":
    key = jax.random.PRNGKey(0)
    k0, k1, k2, k3 = jax.random.split(key, 4)

    # Config 1: toy minGPT size (single q/kv tile per sequence).
    B, T, C, H = 2, 8, 32, 4
    params = _make_params(k0, C)
    x = jax.random.normal(k1, (B, T, C), jnp.float32)
    out = jax.block_until_ready(causal_self_attention(x, params, H))
    ref = _reference(x, params, H)
    assert out.shape == (B, T, C)
    assert jnp.allclose(out, ref, atol=2e-3, rtol=2e-3), "config-1 mismatch vs reference"

    # Config 2: multi-tile path — exercises online softmax across kv blocks,
    # causal block skipping, and the cross-head projection accumulator.
    B2, T2, C2, H2 = 1, 256, 64, 2
    params2 = _make_params(k2, C2)
    x2 = jax.random.normal(k3, (B2, T2, C2), jnp.float32)
    out2 = jax.block_until_ready(causal_self_attention(x2, params2, H2))
    ref2 = _reference(x2, params2, H2)
    assert jnp.allclose(out2, ref2, atol=2e-3, rtol=2e-3), "config-2 mismatch vs reference"

    print("KERNEL_OK")
</pallas_src>

<mosaic_0001>
module attributes {stable_mosaic.version = 11 : i64} {
  func.func @_qkv_proj_kernel(%arg0: i32, %arg1: i32, %arg2: i32, %arg3: memref<1x8x32xf32, #tpu.memory_space<vmem>>, %arg4: memref<1x32x24xf32, #tpu.memory_space<vmem>>, %arg5: memref<1x1x24xf32, #tpu.memory_space<vmem>>, %arg6: memref<1x1x8x8xf32, #tpu.memory_space<vmem>>, %arg7: memref<1x1x8x8xf32, #tpu.memory_space<vmem>>, %arg8: memref<1x1x8x8xf32, #tpu.memory_space<vmem>>) attributes {dimension_semantics = [#tpu.dimension_semantics<parallel>, #tpu.dimension_semantics<parallel>, #tpu.dimension_semantics<parallel>], iteration_bounds = array<i64: 4, 2, 1>, scalar_prefetch = 0 : i64, scratch_operands = 0 : i64, tpu.core_type = #tpu.core_type<tc>, window_params = [{transform_indices = @transform_0, window_bounds = array<i64: 1, 8, 32>}, {transform_indices = @transform_1, window_bounds = array<i64: 1, 32, 24>}, {transform_indices = @transform_2, window_bounds = array<i64: 1, 1, 24>}, {transform_indices = @transform_3, window_bounds = array<i64: 1, 1, 8, 8>}, {transform_indices = @transform_4, window_bounds = array<i64: 1, 1, 8, 8>}, {transform_indices = @transform_5, window_bounds = array<i64: 1, 1, 8, 8>}]} {
    %c0 = arith.constant 0 : index
    %c0_0 = arith.constant 0 : index
    %c0_1 = arith.constant 0 : index
    %0 = vector.load %arg3[%c0, %c0_0, %c0_1] : memref<1x8x32xf32, #tpu.memory_space<vmem>>, vector<1x8x32xf32>
    %1 = vector.shape_cast %0 : vector<1x8x32xf32> to vector<8x32xf32>
    %c0_2 = arith.constant 0 : index
    %c0_3 = arith.constant 0 : index
    %c0_4 = arith.constant 0 : index
    %2 = vector.load %arg4[%c0_2, %c0_3, %c0_4] : memref<1x32x24xf32, #tpu.memory_space<vmem>>, vector<1x32x24xf32>
    %3 = vector.shape_cast %2 : vector<1x32x24xf32> to vector<32x24xf32>
    %c0_5 = arith.constant 0 : index
    %c0_6 = arith.constant 0 : index
    %c0_7 = arith.constant 0 : index
    %4 = vector.load %arg5[%c0_5, %c0_6, %c0_7] : memref<1x1x24xf32, #tpu.memory_space<vmem>>, vector<1x1x24xf32>
    %5 = vector.shape_cast %4 : vector<1x1x24xf32> to vector<1x24xf32>
    %cst = arith.constant dense<0.000000e+00> : vector<8x24xf32>
    %6 = tpu.matmul %1, %3, %cst {dimension_numbers = #tpu.dot_dimension_numbers<[1], [0], [0], [1], [0, 0, 1, 1], [], []>} : vector<8x32xf32>, vector<32x24xf32>, vector<8x24xf32> -> vector<8x24xf32>
    %7 = vector.broadcast %5 : vector<1x24xf32> to vector<8x24xf32>
    %8 = arith.addf %6, %7 : vector<8x24xf32>
    %9 = vector.extract_strided_slice %8 {offsets = [0, 0], sizes = [8, 8], strides = [1, 1]} : vector<8x24xf32> to vector<8x8xf32>
    %cst_8 = arith.constant 0.353553385 : f32
    %10 = vector.broadcast %cst_8 : f32 to vector<8x8xf32>
    %11 = arith.mulf %9, %10 : vector<8x8xf32>
    %c0_9 = arith.constant 0 : index
    %c0_10 = arith.constant 0 : index
    %c0_11 = arith.constant 0 : index
    %c0_12 = arith.constant 0 : index
    %12 = vector.load %arg6[%c0_9, %c0_10, %c0_11, %c0_12] : memref<1x1x8x8xf32, #tpu.memory_space<vmem>>, vector<1x1x8x8xf32>
    %13 = vector.shape_cast %12 : vector<1x1x8x8xf32> to vector<8x8xf32>
    %14 = vector.shape_cast %11 : vector<8x8xf32> to vector<1x1x8x8xf32>
    tpu.vector_store %arg6[%c0_9, %c0_10, %c0_11, %c0_12], %14 {strides = array<i32>} : memref<1x1x8x8xf32, #tpu.memory_space<vmem>>, vector<1x1x8x8xf32>,
    %15 = vector.extract_strided_slice %8 {offsets = [0, 8], sizes = [8, 8], strides = [1, 1]} : vector<8x24xf32> to vector<8x8xf32>
    %c0_13 = arith.constant 0 : index
    %c0_14 = arith.constant 0 : index
    %c0_15 = arith.constant 0 : index
    %c0_16 = arith.constant 0 : index
    %16 = vector.load %arg7[%c0_13, %c0_14, %c0_15, %c0_16] : memref<1x1x8x8xf32, #tpu.memory_space<vmem>>, vector<1x1x8x8xf32>
    %17 = vector.shape_cast %16 : vector<1x1x8x8xf32> to vector<8x8xf32>
    %18 = vector.shape_cast %15 : vector<8x8xf32> to vector<1x1x8x8xf32>
    tpu.vector_store %arg7[%c0_13, %c0_14, %c0_15, %c0_16], %18 {strides = array<i32>} : memref<1x1x8x8xf32, #tpu.memory_space<vmem>>, vector<1x1x8x8xf32>,
    %19 = vector.extract_strided_slice %8 {offsets = [0, 16], sizes = [8, 8], strides = [1, 1]} : vector<8x24xf32> to vector<8x8xf32>
    %c0_17 = arith.constant 0 : index
    %c0_18 = arith.constant 0 : index
    %c0_19 = arith.constant 0 : index
    %c0_20 = arith.constant 0 : index
    %20 = vector.load %arg8[%c0_17, %c0_18, %c0_19, %c0_20] : memref<1x1x8x8xf32, #tpu.memory_space<vmem>>, vector<1x1x8x8xf32>
    %21 = vector.shape_cast %20 : vector<1x1x8x8xf32> to vector<8x8xf32>
    %22 = vector.shape_cast %19 : vector<8x8xf32> to vector<1x1x8x8xf32>
    tpu.vector_store %arg8[%c0_17, %c0_18, %c0_19, %c0_20], %22 {strides = array<i32>} : memref<1x1x8x8xf32, #tpu.memory_space<vmem>>, vector<1x1x8x8xf32>,
    return
  }
  func.func @transform_0(%arg0: i32, %arg1: i32, %arg2: i32) -> (i32, i32, i32) {
    %c0_i32 = arith.constant 0 : i32
    %c0_i32_0 = arith.constant 0 : i32
    return %arg1, %arg2, %c0_i32 : i32, i32, i32
  }
  func.func @transform_1(%arg0: i32, %arg1: i32, %arg2: i32) -> (i32, i32, i32) {
    %c0_i32 = arith.constant 0 : i32
    %c0_i32_0 = arith.constant 0 : i32
    %c0_i32_1 = arith.constant 0 : i32
    return %arg0, %c0_i32, %c0_i32_0 : i32, i32, i32
  }
  func.func @transform_2(%arg0: i32, %arg1: i32, %arg2: i32) -> (i32, i32, i32) {
    %c0_i32 = arith.constant 0 : i32
    %c0_i32_0 = arith.constant 0 : i32
    %c0_i32_1 = arith.constant 0 : i32
    return %arg0, %c0_i32, %c0_i32_0 : i32, i32, i32
  }
  func.func @transform_3(%arg0: i32, %arg1: i32, %arg2: i32) -> (i32, i32, i32, i32) {
    %c0_i32 = arith.constant 0 : i32
    %c0_i32_0 = arith.constant 0 : i32
    return %arg1, %arg0, %arg2, %c0_i32 : i32, i32, i32, i32
  }
  func.func @transform_4(%arg0: i32, %arg1: i32, %arg2: i32) -> (i32, i32, i32, i32) {
    %c0_i32 = arith.constant 0 : i32
    %c0_i32_0 = arith.constant 0 : i32
    return %arg1, %arg0, %arg2, %c0_i32 : i32, i32, i32, i32
  }
  func.func @transform_5(%arg0: i32, %arg1: i32, %arg2: i32) -> (i32, i32, i32, i32) {
    %c0_i32 = arith.constant 0 : i32
    %c0_i32_0 = arith.constant 0 : i32
    return %arg1, %arg0, %arg2, %c0_i32 : i32, i32, i32, i32
  }
}

</mosaic_0001>

<llo_original>
// kernel: tpu_custom_call.1
$region0: #{tpu_custom_call.1}
  #allocation0 [shape = 'u32[]', space=smem, size = 0x4, offset = 0x4, fixed_abs, tag = 'smem constant byte address 0x4 - core index']
  #allocation1 [shape = 'u32[144,128]{1,0:T(1,128)}', space=vmem, size = 0x12000, scoped, tag = 'internal scratch']
  %s0 = inlined_call_operand.vmem [shape: f32[2,8,32], index: 0, kind: input, shape index: {}]
  %s1 = inlined_call_operand.vmem [shape: f32[4,32,24], index: 1, kind: input, shape index: {}]
  %s2 = inlined_call_operand.vmem [shape: f32[4,1,24], index: 2, kind: input, shape index: {}]
  %s3 = inlined_call_operand.hbm [shape: f32[2,4,8,8], index: 3, kind: output, shape index: {0}]
  %s4 = inlined_call_operand.hbm [shape: f32[2,4,8,8], index: 4, kind: output, shape index: {1}]
  %s5 = inlined_call_operand.hbm [shape: f32[2,4,8,8], index: 5, kind: output, shape index: {2}]
  %6 = xla_tuple %s3, %s4, %s5
  %s7 = sld [smem:[#allocation0]]
  $region61: #{tpu_custom_call.1} parent=0
    _
  %s9 = ssub.s32 1, %s7
  %s10 = scalar_select 0, %s9, %s7
  $region1: #{tpu_custom_call.1} parent=0
    #allocation2 [shape = 'u8[8192]{0}', space=vmem, size = 0x2000, scoped, tag = 'output window, operand 0']
    #allocation3 [shape = 's32[2]{0}', space=sflag, size = 0x8, scoped, tag = 'scoped memory for tpu_custom_call.1']
    #allocation4 [shape = 'u8[8192]{0}', space=vmem, size = 0x2000, scoped, tag = 'output window, operand 1']
    #allocation5 [shape = 's32[2]{0}', space=sflag, size = 0x8, scoped, tag = 'scoped memory for tpu_custom_call.1']
    #allocation6 [shape = 'u8[8192]{0}', space=vmem, size = 0x2000, scoped, tag = 'output window, operand 2']
    %11 = vsyncpa [#allocation3], 0
    %s12 = scalar_lea.sflag [#allocation3], 1
    %13 = vsyncpa %s12, 0
    %14 = vsyncpa [#allocation5], 0
    %s15 = scalar_lea.sflag [#allocation5], 1
    %16 = vsyncpa %s15, 0
    loop: start=0, step=1, limit=10
    $region2: #{tpu_custom_call.1} parent=1 // loop_pre_header
      _
    $region3: #{tpu_custom_call.1} parent=1 // loop_header
      %s18 = sphi 0, %s22
      %p19 = scmp.ge.s32.totalorder %s18, 10
      %s25 = sphi 0, %s44
      %s26 = sphi 0, %s40
      %s27 = sphi 0, %s36
      %s28 = sphi 0, %s25
      %s29 = sphi 0, %s26
      %s30 = sphi 0, %s27
      %s31 = sphi 0, %s28
      %s32 = sphi 0, %s29
      %s33 = sphi 0, %s30
      %s49 = sphi 0, %s51
      %s52 = sphi 0, %s49
      %s53 = sphi 0, %s52
      %s69 = sphi 0, %s53
      %s75 = sphi 0, %s77
      %s78 = sphi 0, %s75
      %s79 = sphi 0, %s78
      %s95 = sphi 0, %s79
      %s101 = sphi 0, %s103
      %s104 = sphi 0, %s101
      %s105 = sphi 0, %s104
      %s121 = sphi 0, %s105
      %s131 = sphi 0, %s133
      %s134 = sphi 0, %s131
      %s135 = sphi 0, %s134
      %s151 = sphi 0, %s135
      %s161 = sphi 0, %s163
      %s164 = sphi 0, %s161
      %s165 = sphi 0, %s164
      %s181 = sphi 0, %s165
      %s191 = sphi 0, %s193
      %s194 = sphi 0, %s191
      %s195 = sphi 0, %s194
      %s211 = sphi 0, %s195
    $region4: #{tpu_custom_call.1} parent=1 // loop_header_branch
      %21 = sbr.rel (%p19) target = $region8
    $region5: #{tpu_custom_call.1} parent=1 // loop_body
      %s23 = ssub.s32 %s18, 1
      %s24 = ssub.s32 %s18, 2
      %s34 = sadd.s32 1, %s27
      %p35 = scmp.ge.s32.totalorder %s34, 1
      %s36 = scalar_select %p35, 0, %s34
      %s37 = sadd.s32 1, %s26
      %s38 = scalar_select %p35, %s37, %s26
      %p39 = scmp.ge.s32.totalorder %s38, 2
      %s40 = scalar_select %p39, 0, %s38
      %s41 = sadd.s32 1, %s25
      %s42 = scalar_select %p39, %s41, %s25
      %p43 = scmp.ge.s32.totalorder %s42, 4
      %s44 = scalar_select %p43, 0, %s42
      %s45 = ssub.s32 %s26, %s40
      %s46 = ssub.s32 %s27, %s36
      %s47 = sor.u32 %s45, %s46
      %p48 = scmp.eq.s32.totalorder %s47, 0
      %s50 = sadd.s32 %s49, 1
      %s51 = scalar_select %p48, %s49, %s50
      %p54 = pneg %p48
      %p55 = scmp.eq.s32.totalorder %s18, 7
      %p56 = por %p54, %p55
      %p57 = scmp.ne.s32.totalorder %s49, %s52
      %p58 = scmp.eq.s32.totalorder %s18, 0
      %p59 = por %p57, %p58
      %p60 = scmp.ne.s32.totalorder %s49, %s52
      %p61 = scmp.eq.s32.totalorder %s23, 7
      %p62 = por %p60, %p61
      %p63 = scmp.ne.s32.totalorder %s52, %s53
      %p64 = scmp.eq.s32.totalorder %s23, 0
      %p65 = por %p63, %p64
      %p66 = scmp.ne.s32.totalorder %s52, %s53
      %p67 = scmp.eq.s32.totalorder %s24, 7
      %p68 = por %p66, %p67
      %p70 = scmp.ne.s32.totalorder %s53, %s69
      %p71 = scmp.eq.s32.totalorder %s24, 0
      %p72 = por %p70, %p71
      %s73 = ssub.s32 %s25, %s44
      %p74 = scmp.eq.s32.totalorder %s73, 0
      %s76 = sadd.s32 %s75, 1
      %s77 = scalar_select %p74, %s75, %s76
      %p80 = pneg %p74
      %p81 = scmp.eq.s32.totalorder %s18, 7
      %p82 = por %p80, %p81
      %p83 = scmp.ne.s32.totalorder %s75, %s78
      %p84 = scmp.eq.s32.totalorder %s18, 0
      %p85 = por %p83, %p84
      %p86 = scmp.ne.s32.totalorder %s75, %s78
      %p87 = scmp.eq.s32.totalorder %s23, 7
      %p88 = por %p86, %p87
      %p89 = scmp.ne.s32.totalorder %s78, %s79
      %p90 = scmp.eq.s32.totalorder %s23, 0
      %p91 = por %p89, %p90
      %p92 = scmp.ne.s32.totalorder %s78, %s79
      %p93 = scmp.eq.s32.totalorder %s24, 7
      %p94 = por %p92, %p93
      %p96 = scmp.ne.s32.totalorder %s79, %s95
      %p97 = scmp.eq.s32.totalorder %s24, 0
      %p98 = por %p96, %p97
      %s99 = ssub.s32 %s25, %s44
      %p100 = scmp.eq.s32.totalorder %s99, 0
      %s102 = sadd.s32 %s101, 1
      %s103 = scalar_select %p100, %s101, %s102
      %p106 = pneg %p100
      %p107 = scmp.eq.s32.totalorder %s18, 7
      %p108 = por %p106, %p107
      %p109 = scmp.ne.s32.totalorder %s101, %s104
      %p110 = scmp.eq.s32.totalorder %s18, 0
      %p111 = por %p109, %p110
      %p112 = scmp.ne.s32.totalorder %s101, %s104
      %p113 = scmp.eq.s32.totalorder %s23, 7
      %p114 = por %p112, %p113
      %p115 = scmp.ne.s32.totalorder %s104, %s105
      %p116 = scmp.eq.s32.totalorder %s23, 0
      %p117 = por %p115, %p116
      %p118 = scmp.ne.s32.totalorder %s104, %s105
      %p119 = scmp.eq.s32.totalorder %s24, 7
      %p120 = por %p118, %p119
      %p122 = scmp.ne.s32.totalorder %s105, %s121
      %p123 = scmp.eq.s32.totalorder %s24, 0
      %p124 = por %p122, %p123
      %s125 = ssub.s32 %s26, %s40
      %s126 = ssub.s32 %s25, %s44
      %s127 = sor.u32 %s125, %s126
      %s128 = ssub.s32 %s27, %s36
      %s129 = sor.u32 %s127, %s128
      %p130 = scmp.eq.s32.totalorder %s129, 0
      %s132 = sadd.s32 %s131, 1
      %s133 = scalar_select %p130, %s131, %s132
      %p136 = pneg %p130
      %p137 = scmp.eq.s32.totalorder %s18, 7
      %p138 = por %p136, %p137
      %p139 = scmp.ne.s32.totalorder %s131, %s134
      %p140 = scmp.eq.s32.totalorder %s18, 0
      %p141 = por %p139, %p140
      %p142 = scmp.ne.s32.totalorder %s131, %s134
      %p143 = scmp.eq.s32.totalorder %s23, 7
      %p144 = por %p142, %p143
      %p145 = scmp.ne.s32.totalorder %s134, %s135
      %p146 = scmp.eq.s32.totalorder %s23, 0
      %p147 = por %p145, %p146
      %p148 = scmp.ne.s32.totalorder %s134, %s135
      %p149 = scmp.eq.s32.totalorder %s24, 7
      %p150 = por %p148, %p149
      %p152 = scmp.ne.s32.totalorder %s135, %s151
      %p153 = scmp.eq.s32.totalorder %s24, 0
      %p154 = por %p152, %p153
      %s155 = ssub.s32 %s26, %s40
      %s156 = ssub.s32 %s25, %s44
      %s157 = sor.u32 %s155, %s156
      %s158 = ssub.s32 %s27, %s36
      %s159 = sor.u32 %s157, %s158
      %p160 = scmp.eq.s32.totalorder %s159, 0
      %s162 = sadd.s32 %s161, 1
      %s163 = scalar_select %p160, %s161, %s162
      %p166 = pneg %p160
      %p167 = scmp.eq.s32.totalorder %s18, 7
      %p168 = por %p166, %p167
      %p169 = scmp.ne.s32.totalorder %s161, %s164
      %p170 = scmp.eq.s32.totalorder %s18, 0
      %p171 = por %p169, %p170
      %p172 = scmp.ne.s32.totalorder %s161, %s164
      %p173 = scmp.eq.s32.totalorder %s23, 7
      %p174 = por %p172, %p173
      %p175 = scmp.ne.s32.totalorder %s164, %s165
      %p176 = scmp.eq.s32.totalorder %s23, 0
      %p177 = por %p175, %p176
      %p178 = scmp.ne.s32.totalorder %s164, %s165
      %p179 = scmp.eq.s32.totalorder %s24, 7
      %p180 = por %p178, %p179
      %p182 = scmp.ne.s32.totalorder %s165, %s181
      %p183 = scmp.eq.s32.totalorder %s24, 0
      %p184 = por %p182, %p183
      %s185 = ssub.s32 %s26, %s40
      %s186 = ssub.s32 %s25, %s44
      %s187 = sor.u32 %s185, %s186
      %s188 = ssub.s32 %s27, %s36
      %s189 = sor.u32 %s187, %s188
      %p190 = scmp.eq.s32.totalorder %s189, 0
      %s192 = sadd.s32 %s191, 1
      %s193 = scalar_select %p190, %s191, %s192
      %p196 = pneg %p190
      %p197 = scmp.eq.s32.totalorder %s18, 7
      %p198 = por %p196, %p197
      %p199 = scmp.ne.s32.totalorder %s191, %s194
      %p200 = scmp.eq.s32.totalorder %s18, 0
      %p201 = por %p199, %p200
      %p202 = scmp.ne.s32.totalorder %s191, %s194
      %p203 = scmp.eq.s32.totalorder %s23, 7
      %p204 = por %p202, %p203
      %p205 = scmp.ne.s32.totalorder %s194, %s195
      %p206 = scmp.eq.s32.totalorder %s23, 0
      %p207 = por %p205, %p206
      %p208 = scmp.ne.s32.totalorder %s194, %s195
      %p209 = scmp.eq.s32.totalorder %s24, 7
      %p210 = por %p208, %p209
      %p212 = scmp.ne.s32.totalorder %s195, %s211
      %p213 = scmp.eq.s32.totalorder %s24, 0
      %p214 = por %p212, %p213
      %p215 = scmp.le.s32.totalorder 1, %s18
      %p216 = scmp.lt.s32.totalorder %s18, 9
      %p217 = pnand %p215, %p216
      %p218 = pneg %p217
      // Predicated region
      $region9: #{tpu_custom_call.1} parent=5 // pred_check
        _
      $region10: #{tpu_custom_call.1} parent=5 // pred_check_branch
        %220 = sbr.rel (%p217) target = $region12
      $region11: #{tpu_custom_call.1} parent=5 // pred_region
        %s221 = ssub.s32 %s18, 1
      $region12: #{tpu_custom_call.1} parent=5 // pred_fallthru
        _
      %p222 = scmp.lt.s32.totalorder %s18, 8
      // Predicated region
      $region13: #{tpu_custom_call.1} parent=5 // pred_check
        %p223 = pneg %p222
      $region14: #{tpu_custom_call.1} parent=5 // pred_check_branch
        %225 = sbr.rel (%p223) target = $region16
      $region15: #{tpu_custom_call.1} parent=5 // pred_region
        // Predicated region
        $region17: #{tpu_custom_call.1} parent=15 // pred_check
          %p226 = pneg %p59
        $region18: #{tpu_custom_call.1} parent=15 // pred_check_branch
          %228 = sbr.rel (%p226) target = $region20
        $region19: #{tpu_custom_call.1} parent=15 // pred_region
          %p229 = scmp.lt.s32.totalorder %s26, 1
          %s230 = scalar_select %p229, %s26, 1
          %p231 = scmp.lt.s32.totalorder %s27, 0
          %s232 = scalar_select %p231, %s27, 0
          %s233 = sadd.s32 %s232, %s230
          %s234 = smul.addr %s233, 8
          %s235 = scalar_lea.vmem %s0, %s234
        $region20: #{tpu_custom_call.1} parent=15 // pred_fallthru
          _
        // Predicated region
        $region21: #{tpu_custom_call.1} parent=15 // pred_check
          %p236 = pneg %p85
        $region22: #{tpu_custom_call.1} parent=15 // pred_check_branch
          %238 = sbr.rel (%p236) target = $region24
        $region23: #{tpu_custom_call.1} parent=15 // pred_region
          %p239 = scmp.lt.s32.totalorder %s25, 3
          %s240 = scalar_select %p239, %s25, 3
          %s241 = smul.addr %s240, 4
          %s242 = smul.addr %s241, 8
          %s243 = scalar_lea.vmem %s1, %s242
        $region24: #{tpu_custom_call.1} parent=15 // pred_fallthru
          _
        // Predicated region
        $region25: #{tpu_custom_call.1} parent=15 // pred_check
          %p244 = pneg %p111
        $region26: #{tpu_custom_call.1} parent=15 // pred_check_branch
          %246 = sbr.rel (%p244) target = $region28
        $region27: #{tpu_custom_call.1} parent=15 // pred_region
          %p247 = scmp.lt.s32.totalorder %s25, 3
          %s248 = scalar_select %p247, %s25, 3
          %s249 = scalar_lea.vmem %s2, %s248
        $region28: #{tpu_custom_call.1} parent=15 // pred_fallthru
          _
      $region16: #{tpu_custom_call.1} parent=5 // pred_fallthru
        _
      %p250 = scmp.le.s32.totalorder 1, %s18
      %p251 = scmp.lt.s32.totalorder %s18, 9
      %p252 = pnand %p250, %p251
      %p253 = pneg %p252
      // Predicated region
      $region29: #{tpu_custom_call.1} parent=5 // pred_check
        _
      $region30: #{tpu_custom_call.1} parent=5 // pred_check_branch
        %255 = sbr.rel (%p252) target = $region32
      $region31: #{tpu_custom_call.1} parent=5 // pred_region
        %s256 = ssub.s32 %s18, 1
        %p257 = scmp.lt.s32.totalorder %s29, 1
        %s258 = scalar_select %p257, %s29, 1
        %p259 = scmp.lt.s32.totalorder %s30, 0
        %s260 = scalar_select %p259, %s30, 0
        %s261 = sadd.s32 %s260, %s258
        %s262 = smul.addr %s261, 8
        %s263 = scalar_lea.vmem %s0, %s262
        %p264 = pneg %p65
        %p265 = pneg %p62
        %p266 = scmp.lt.s32.totalorder %s28, 3
        %s267 = scalar_select %p266, %s28, 3
        %s268 = smul.addr %s267, 4
        %s269 = smul.addr %s268, 8
        %s270 = scalar_lea.vmem %s1, %s269
        %p271 = pneg %p91
        %p272 = pneg %p88
        %p273 = scmp.lt.s32.totalorder %s28, 3
        %s274 = scalar_select %p273, %s28, 3
        %s275 = scalar_lea.vmem %s2, %s274
        %p276 = pneg %p117
        %p277 = pneg %p114
        %p278 = pneg %p147
        %p279 = pneg %p144
        %s280 = sand.u32 %s134, 1
        %s281 = scalar_lea.sflag [#allocation3], %s280
        %s282 = sand.u32 %s134, 1
        %s283 = smul.addr %s282, 8
        %s284 = scalar_lea.vmem [#allocation2], %s283
        %p285 = pneg %p177
        %p286 = pneg %p174
        %s287 = sand.u32 %s23, 1
        %s288 = scalar_lea.sflag [#allocation5], %s287
        %s289 = sand.u32 %s164, 1
        %s290 = smul.addr %s289, 8
        %s291 = scalar_lea.vmem [#allocation4], %s290
        %p292 = pneg %p207
        %p293 = pneg %p204
        %s294 = sand.u32 %s23, 1
        %s295 = scalar_lea.sflag [#allocation5], %s294
        %s296 = sand.u32 %s194, 1
        %s297 = smul.addr %s296, 8
        %s298 = scalar_lea.vmem [#allocation6], %s297
        %p299 = scmp.lt.s32.totalorder %s29, 1
        %s300 = scalar_select %p299, %s29, 1
        %p301 = scmp.lt.s32.totalorder %s30, 0
        %s302 = scalar_select %p301, %s30, 0
        %s303 = sadd.s32 %s302, %s300
        %s304 = smul.addr %s303, 8
        %s305 = scalar_lea.vmem %s0, %s304
        %p306 = scmp.lt.s32.totalorder %s28, 3
        %s307 = scalar_select %p306, %s28, 3
        %s308 = smul.addr %s307, 4
        %s309 = smul.addr %s308, 8
        %s310 = scalar_lea.vmem %s1, %s309
        %p311 = scmp.lt.s32.totalorder %s28, 3
        %s312 = scalar_select %p311, %s28, 3
        %s313 = scalar_lea.vmem %s2, %s312
        %v314 = vld [vmem:[%s305] sm:$0xff]
        %v315 = vld [vmem:[%s310] sm:$0xff]
        %v316 = vld [vmem:[%s310 + $0x8] sm:$0xff]
        %v317 = vld [vmem:[%s310 + $0x10] sm:$0xff]
        %v318 = vld [vmem:[%s310 + $0x18] sm:$0xff]
        %v319 = vld [vmem:[%s313] sm:$0x1]
        %v321 = vlaneseq
        %v322 = vshrl.u32 %v321, 7
        %v323 = vsub.s32 0, %v322
        %v324 = vrot.slane %v319, %v323
        %vm326 = vcmask 261120
        %v328 = vsel %vm326, %v314, 0
        %330 = vmatprep.subr.mxu0 0.0
        %331 = vmatpush1.msra.mxu0 0.0
        %332 = vmatprep.subr.mxu0 0.0
        %333 = vmatpush1.msra.mxu0 0.0
        %334 = vmatprep.subr.mxu0 0.0
        %335 = vmatpush1.msra.mxu0 0.0
        %336 = vmatprep.subr.mxu0 0.0
        %337 = vmatpush1.msra.mxu0 0.0
        %338 = vmatprep.subr.mxu0 0.0
        %339 = vmatpush1.msra.mxu0 0.0
        %340 = vmatprep.subr.mxu0 0.0
        %341 = vmatpush1.msra.mxu0 0.0
        %342 = vmatprep.subr.mxu0 0.0
        %343 = vmatpush1.msra.mxu0 0.0
        %344 = vmatprep.subr.mxu0 0.0
        %345 = vmatpush1.msra.mxu0 0.0
        %346 = vmatprep.subr.mxu0 0.0
        %347 = vmatpush1.msra.mxu0 0.0
        %348 = vmatprep.subr.mxu0 0.0
        %349 = vmatpush1.msra.mxu0 0.0
        %350 = vmatprep.subr.mxu0 0.0
        %351 = vmatpush1.msra.mxu0 0.0
        %352 = vmatprep.subr.mxu0 0.0
        %353 = vmatpush1.msra.mxu0 0.0
        %354 = vmatprep.subr.mxu0 0.0
        %355 = vmatpush1.msra.mxu0 %v318
        %356 = vmatprep.subr.mxu0 0.0
        %357 = vmatpush1.msra.mxu0 %v317
        %358 = vmatprep.subr.mxu0 0.0
        %359 = vmatpush1.msra.mxu0 %v316
        %360 = vmatprep.subr.mxu0 0.0
        %361 = vmatpush1.msra.mxu0 %v315
        %362 = vmatprep.subr.mxu0 0.0
        %363 = vmatpush2.msra.mxu0 0.0
        %364 = vmatprep.subr.mxu0 0.0
        %365 = vmatpush2.msra.mxu0 0.0
        %366 = vmatprep.subr.mxu0 0.0
        %367 = vmatpush2.msra.mxu0 0.0
        %368 = vmatprep.subr.mxu0 0.0
        %369 = vmatpush2.msra.mxu0 0.0
        %370 = vmatprep.subr.mxu0 0.0
        %371 = vmatpush2.msra.mxu0 0.0
        %372 = vmatprep.subr.mxu0 0.0
        %373 = vmatpush2.msra.mxu0 0.0
        %374 = vmatprep.subr.mxu0 0.0
        %375 = vmatpush2.msra.mxu0 0.0
        %376 = vmatprep.subr.mxu0 0.0
        %377 = vmatpush2.msra.mxu0 0.0
        %378 = vmatprep.subr.mxu0 0.0
        %379 = vmatpush2.msra.mxu0 0.0
        %380 = vmatprep.subr.mxu0 0.0
        %381 = vmatpush2.msra.mxu0 0.0
        %382 = vmatprep.subr.mxu0 0.0
        %383 = vmatpush2.msra.mxu0 0.0
        %384 = vmatprep.subr.mxu0 0.0
        %385 = vmatpush2.msra.mxu0 0.0
        %386 = vmatprep.subr.mxu0 0.0
        %387 = vmatpush2.msra.mxu0 0.0
        %388 = vmatprep.subr.mxu0 0.0
        %389 = vmatpush2.msra.mxu0 0.0
        %390 = vmatprep.subr.mxu0 0.0
        %391 = vmatpush2.msra.mxu0 0.0
        %392 = vmatprep.subr.mxu0 0.0
        %393 = vmatpush2.msra.mxu0 0.0
        %394 = vmatprep.mubr.f32.mxu0 0.0
        %395 = vmatmul.mubr.f32.gmra.mxu0 %v328
        %v396 = vpop.f32.mrf.mxu0
        %v397 = vadd.f32 %v324, %v396
        %v398 = vpop.f32.mrf.mxu0
        %399 = vdwg.mxu0
        %v400 = vmul.f32 %v397, 0.35355338
        %vm401 = vcmask 64512
        %402 = vst.msk [vmem:[%s284] sm:$0xff] %vm401, %v400
        %404 = vrot.lane.b32.xlu0 %v397, 120
        %v405 = vpop.permute.xlu0 %404
        %407 = vst.msk [vmem:[%s291] sm:$0xff] %vm401, %v405
        %408 = vrot.lane.b32.xlu0 %v397, 112
        %v409 = vpop.permute.xlu0 %408
        %411 = vst.msk [vmem:[%s298] sm:$0xff] %vm401, %v409
        %s412 = sand.u32 %s134, 1
        %s413 = scalar_lea.sflag [#allocation3], %s412
        %s414 = sand.u32 %s134, 1
        %s415 = smul.addr %s414, 8
        %s416 = scalar_lea.vmem [#allocation2], %s415
        %s417 = sand.u32 %s23, 1
        %s418 = scalar_lea.sflag [#allocation5], %s417
        %s419 = sand.u32 %s164, 1
        %s420 = smul.addr %s419, 8
        %s421 = scalar_lea.vmem [#allocation4], %s420
        %s422 = sand.u32 %s23, 1
        %s423 = scalar_lea.sflag [#allocation5], %s422
        %s424 = sand.u32 %s194, 1
        %s425 = smul.addr %s424, 8
        %s426 = scalar_lea.vmem [#allocation6], %s425
        // Predicated region
        $region33: #{tpu_custom_call.1} parent=31 // pred_check
          %p427 = pneg %p144
        $region34: #{tpu_custom_call.1} parent=31 // pred_check_branch
          %429 = sbr.rel (%p427) target = $region36
        $region35: #{tpu_custom_call.1} parent=31 // pred_region
          %s431 = ssub.s32 128, 128
          %432 = vsyncadd %s413, %s431
          %s433 = sadd.s32 %s30, %s28
          %s434 = smul.addr %s29, 4
          %s435 = sadd.s32 %s433, %s434
          %s436 = smul.addr %s435, 128
          %s437 = scalar_lea.hbm %s3, %s436
          %s439 = sshll.u32 %s416, 4
          %s440 = int_to_ptr.vmem [resolvable:$true] %s439
          %442 = dma.vmem_to_hbm [thread:$0]  %s440, 128, %s437, %s413
        $region36: #{tpu_custom_call.1} parent=31 // pred_fallthru
          _
        // Predicated region
        $region37: #{tpu_custom_call.1} parent=31 // pred_check
          %p443 = pneg %p174
        $region38: #{tpu_custom_call.1} parent=31 // pred_check_branch
          %445 = sbr.rel (%p443) target = $region40
        $region39: #{tpu_custom_call.1} parent=31 // pred_region
          %s447 = ssub.s32 128, 128
          %448 = vsyncadd %s418, %s447
          %s449 = sadd.s32 %s30, %s28
          %s450 = smul.addr %s29, 4
          %s451 = sadd.s32 %s449, %s450
          %s452 = smul.addr %s451, 128
          %s453 = scalar_lea.hbm %s4, %s452
          %s455 = sshll.u32 %s421, 4
          %s456 = int_to_ptr.vmem [resolvable:$true] %s455
          %458 = dma.vmem_to_hbm [thread:$0]  %s456, 128, %s453, %s418
        $region40: #{tpu_custom_call.1} parent=31 // pred_fallthru
          _
        // Predicated region
        $region41: #{tpu_custom_call.1} parent=31 // pred_check
          %p459 = pneg %p204
        $region42: #{tpu_custom_call.1} parent=31 // pred_check_branch
          %461 = sbr.rel (%p459) target = $region44
        $region43: #{tpu_custom_call.1} parent=31 // pred_region
          %s463 = ssub.s32 128, 128
          %464 = vsyncadd %s423, %s463
          %s465 = sadd.s32 %s30, %s28
          %s466 = smul.addr %s29, 4
          %s467 = sadd.s32 %s465, %s466
          %s468 = smul.addr %s467, 128
          %s469 = scalar_lea.hbm %s5, %s468
          %s471 = sshll.u32 %s426, 4
          %s472 = int_to_ptr.vmem [resolvable:$true] %s471
          %474 = dma.vmem_to_hbm [thread:$0]  %s472, 128, %s469, %s423
        $region44: #{tpu_custom_call.1} parent=31 // pred_fallthru
          _
      $region32: #{tpu_custom_call.1} parent=5 // pred_fallthru
        _
      %p475 = scmp.le.s32.totalorder 2, %s18
      // Predicated region
      $region45: #{tpu_custom_call.1} parent=5 // pred_check
        %p476 = pneg %p475
      $region46: #{tpu_custom_call.1} parent=5 // pred_check_branch
        %478 = sbr.rel (%p476) target = $region48
      $region47: #{tpu_custom_call.1} parent=5 // pred_region
        %s479 = ssub.s32 %s18, 2
        // Predicated region
        $region49: #{tpu_custom_call.1} parent=47 // pred_check
          %p480 = pneg %p150
        $region50: #{tpu_custom_call.1} parent=47 // pred_check_branch
          %482 = sbr.rel (%p480) target = $region52
        $region51: #{tpu_custom_call.1} parent=47 // pred_region
          %s483 = sand.u32 %s135, 1
          %s484 = scalar_lea.sflag [#allocation3], %s483
          %s485 = sand.u32 %s135, 1
          %s486 = smul.addr %s485, 8
          %s487 = scalar_lea.vmem [#allocation2], %s486
          %488 = dma.done %s484, 128
        $region52: #{tpu_custom_call.1} parent=47 // pred_fallthru
          _
        // Predicated region
        $region53: #{tpu_custom_call.1} parent=47 // pred_check
          %p489 = pneg %p180
        $region54: #{tpu_custom_call.1} parent=47 // pred_check_branch
          %491 = sbr.rel (%p489) target = $region56
        $region55: #{tpu_custom_call.1} parent=47 // pred_region
          %s492 = sand.u32 %s24, 1
          %s493 = scalar_lea.sflag [#allocation5], %s492
          %s494 = sand.u32 %s165, 1
          %s495 = smul.addr %s494, 8
          %s496 = scalar_lea.vmem [#allocation4], %s495
          %497 = dma.done %s493, 128
        $region56: #{tpu_custom_call.1} parent=47 // pred_fallthru
          _
        // Predicated region
        $region57: #{tpu_custom_call.1} parent=47 // pred_check
          %p498 = pneg %p210
        $region58: #{tpu_custom_call.1} parent=47 // pred_check_branch
          %500 = sbr.rel (%p498) target = $region60
        $region59: #{tpu_custom_call.1} parent=47 // pred_region
          %s501 = sand.u32 %s24, 1
          %s502 = scalar_lea.sflag [#allocation5], %s501
          %s503 = sand.u32 %s195, 1
          %s504 = smul.addr %s503, 8
          %s505 = scalar_lea.vmem [#allocation6], %s504
          %506 = dma.done %s502, 128
        $region60: #{tpu_custom_call.1} parent=47 // pred_fallthru
          _
      $region48: #{tpu_custom_call.1} parent=5 // pred_fallthru
        _
    $region6: #{tpu_custom_call.1} parent=1 // loop_footer
      %s22 = sadd.s32 1, %s18
    $region7: #{tpu_custom_call.1} parent=1 // loop_footer_branch
      %17 = sbr.rel target = $region3
    $region8: #{tpu_custom_call.1} parent=1 // loop_exit
      _
    %507 = vsyncpa [#allocation3], 1
    %s508 = scalar_lea.sflag [#allocation3], 1
    %509 = vsyncpa %s508, 1
    %510 = vsyncpa [#allocation5], 1
    %s511 = scalar_lea.sflag [#allocation5], 1
    %512 = vsyncpa %s511, 1

</llo_original>
